<compile_context>
chip_gen: v6e
topology: v6e:2x2x1
jax: 0.10.0
libtpu: 0.0.40
codegen_flags: <defaults>
</compile_context>

<pallas_src>
import functools
import math

import jax
import jax.numpy as jnp
from jax.experimental import pallas as pl
from jax.experimental.pallas import tpu as pltpu

EPS = 1e-5
_VMEM_TILE_BUDGET = 24 * 1024 * 1024   # conservative double-buffered tile budget (fits v7x 64 MiB)
_VMEM_LIMIT_CAP = 56 * 1024 * 1024


def _round_up(x, m):
    return ((x + m - 1) // m) * m


def _row_tile(m):
    """Pick a row-tile size that divides M and satisfies the (8,128) rule."""
    for t in (512, 256, 128, 64, 32, 16, 8):
        if m % t == 0:
            return t
    return m  # fall back to full extent (block == array dim is always legal)


def _lane_fold_factor(m, c):
    """Fold f rows into the lane dim so the last dim (c*f) is a multiple of 128."""
    if c % 128 == 0:
        return 1
    f0 = 128 // math.gcd(c, 128)
    candidates = []
    f = f0
    while f <= m:
        if m % f == 0:
            candidates.append(f)
        f *= 2
    if not candidates:
        return 1
    good = [f for f in candidates if m // f >= 8]
    return max(good) if good else min(candidates)


# ----------------------------------------------------------------------------
# Kernel 1: fused inference-BatchNorm + ReLU (elementwise, VPU)
# Only used for bn1 (the padding of conv1 must be applied AFTER this ReLU,
# so it cannot be folded into conv1's matmul prologue).  bn2+relu is fused
# into conv1's matmul epilogue instead (see Kernel 2).
# ----------------------------------------------------------------------------
def _bn_relu_kernel(x_ref, scale_ref, shift_ref, o_ref):
    x = x_ref[...].astype(jnp.float32)
    y = x * scale_ref[...] + shift_ref[...]
    o_ref[...] = jnp.maximum(y, 0.0).astype(o_ref.dtype)


def bn_relu(x2d, scale, shift):
    m, c = x2d.shape
    # Fold rows into lanes so blocks are lane-dense (>=128-wide stores).
    f = _lane_fold_factor(m, c)
    mf, cf = m // f, c * f
    xf = x2d.reshape(mf, cf)
    scale_f = jnp.tile(scale.reshape(1, c).astype(jnp.float32), (1, f))
    shift_f = jnp.tile(shift.reshape(1, c).astype(jnp.float32), (1, f))
    tm = _row_tile(mf)
    out = pl.pallas_call(
        _bn_relu_kernel,
        out_shape=jax.ShapeDtypeStruct((mf, cf), jnp.float32),
        grid=(mf // tm,),
        in_specs=[
            pl.BlockSpec((tm, cf), lambda i: (i, 0)),
            pl.BlockSpec((1, cf), lambda i: (0, 0)),
            pl.BlockSpec((1, cf), lambda i: (0, 0)),
        ],
        out_specs=pl.BlockSpec((tm, cf), lambda i: (i, 0)),
        compiler_params=pltpu.CompilerParams(dimension_semantics=("parallel",)),
    )(xf, scale_f, shift_f)
    return out.reshape(m, c)


# ----------------------------------------------------------------------------
# Kernel 2: K-tiled MXU matmul with f32 VMEM accumulator and a fused epilogue
#           (optional BN scale/shift, optional ReLU, optional residual add).
# ----------------------------------------------------------------------------
def _fused_matmul_kernel(a_ref, b_ref, scale_ref, shift_ref, *rest,
                         relu, has_residual):
    if has_residual:
        r_ref, o_ref, acc_ref = rest
    else:
        o_ref, acc_ref = rest
    kk = pl.program_id(2)

    @pl.when(kk == 0)
    def _init():
        acc_ref[...] = jnp.zeros_like(acc_ref)

    acc_ref[...] += jnp.dot(a_ref[...], b_ref[...],
                            preferred_element_type=jnp.float32)

    @pl.when(kk == pl.num_programs(2) - 1)
    def _finalize():
        y = acc_ref[...] * scale_ref[...] + shift_ref[...]
        if relu:
            y = jnp.maximum(y, 0.0)
        if has_residual:
            y = y + r_ref[...].astype(jnp.float32)
        o_ref[...] = y.astype(o_ref.dtype)


def fused_matmul(a, b, scale=None, shift=None, residual=None, relu=False,
                 out_dtype=jnp.float32, compute_dtype=None):
    """out = epilogue(a @ b); epilogue = [*scale+shift][relu][+residual]."""
    m, k = a.shape
    k2, n = b.shape
    assert k == k2
    if compute_dtype is not None:
        # e.g. jnp.bfloat16 to feed the 256-wide MXU on v6e/v7x; acc stays f32.
        a = a.astype(compute_dtype)
        b = b.astype(compute_dtype)
    itb = a.dtype.itemsize

    # --- K tiling (pad K to a multiple of the K tile when tiled) -------------
    if k > 512:
        tk = 512
        k_pad = _round_up(k, tk)
        if k_pad != k:
            a = jnp.pad(a, ((0, 0), (0, k_pad - k)))
            b = jnp.pad(b, ((0, k_pad - k), (0, 0)))
        k = k_pad
    else:
        tk = k  # full-K block (legal for any K)

    # --- N tiling -------------------------------------------------------------
    if n % 256 == 0:
        tn = 256
    elif n % 128 == 0:
        tn = 128
    else:
        tn = n  # full-N block (legal for any N)

    # --- M tiling under a VMEM budget (double-buffered A/B/res/out + acc) ----
    tm = None
    foot = 0
    for cand in (1024, 512, 256, 128, 64, 32, 16, 8):
        if m % cand:
            continue
        f = (2 * cand * tk * itb + 2 * tk * tn * itb
             + 2 * cand * tn * 4 + cand * tn * 4)
        if residual is not None:
            f += 2 * cand * tn * 4
        if f <= _VMEM_TILE_BUDGET:
            tm, foot = cand, f
            break
    if tm is None:
        tm = m
        foot = (2 * tm * tk * itb + 2 * tk * tn * itb + 3 * tm * tn * 4
                + (2 * tm * tn * 4 if residual is not None else 0))
    vmem_limit = int(min(_VMEM_LIMIT_CAP, max(32 * 1024 * 1024, 2 * foot)))

    # --- BN epilogue parameters (defaults = identity) -------------------------
    if scale is None:
        scale = jnp.ones((n,), jnp.float32)
    if shift is None:
        shift = jnp.zeros((n,), jnp.float32)
    scale2 = scale.reshape(1, n).astype(jnp.float32)
    shift2 = shift.reshape(1, n).astype(jnp.float32)

    in_specs = [
        pl.BlockSpec((tm, tk), lambda i, j, kk: (i, kk)),
        pl.BlockSpec((tk, tn), lambda i, j, kk: (kk, j)),
        pl.BlockSpec((1, tn), lambda i, j, kk: (0, j)),
        pl.BlockSpec((1, tn), lambda i, j, kk: (0, j)),
    ]
    args = [a, b, scale2, shift2]
    if residual is not None:
        in_specs.append(pl.BlockSpec((tm, tn), lambda i, j, kk: (i, j)))
        args.append(residual.astype(jnp.float32))

    cost = pl.CostEstimate(
        flops=2 * m * n * k,
        transcendentals=0,
        bytes_accessed=(m * k + k * n) * itb
        + m * n * 4 * (2 if residual is not None else 1) + 2 * n * 4,
    )

    kernel = functools.partial(_fused_matmul_kernel, relu=relu,
                               has_residual=residual is not None)
    return pl.pallas_call(
        kernel,
        out_shape=jax.ShapeDtypeStruct((m, n), out_dtype),
        grid=(m // tm, n // tn, k // tk),
        in_specs=in_specs,
        out_specs=pl.BlockSpec((tm, tn), lambda i, j, kk: (i, j)),
        scratch_shapes=[pltpu.VMEM((tm, tn), jnp.float32)],
        compiler_params=pltpu.CompilerParams(
            dimension_semantics=("parallel", "parallel", "arbitrary"),
            vmem_limit_bytes=vmem_limit,
        ),
        cost_estimate=cost,
    )(*args)


# ----------------------------------------------------------------------------
# Convolution wrappers (im2col glue in JAX, fused matmul hot path in Pallas)
# ----------------------------------------------------------------------------
def _im2col_3x3(x_nhwc, stride):
    n, h, w, c = x_nhwc.shape
    ho = (h + 2 - 3) // stride + 1
    wo = (w + 2 - 3) // stride + 1
    xp = jnp.pad(x_nhwc, ((0, 0), (1, 1), (1, 1), (0, 0)))
    cols = []
    for kh in range(3):
        for kw in range(3):
            patch = xp[
                :,
                kh: kh + (ho - 1) * stride + 1: stride,
                kw: kw + (wo - 1) * stride + 1: stride,
                :,
            ]
            cols.append(patch.reshape(n * ho * wo, c))
    return jnp.concatenate(cols, axis=1), (n, ho, wo)


def conv3x3_fused(x_nhwc, w_oihw, stride, *, scale=None, shift=None, relu=False,
                  extra_cols=None, extra_w=None, residual2d=None):
    """3x3 conv (padding=1) with fused BN/ReLU epilogue, optional fused 1x1
    shortcut (concatenated along K) or fused residual add.  Returns NHWC."""
    cols, (n, ho, wo) = _im2col_3x3(x_nhwc, stride)
    cout, cin = w_oihw.shape[0], w_oihw.shape[1]
    wm = jnp.transpose(w_oihw, (2, 3, 1, 0)).reshape(9 * cin, cout)
    if extra_cols is not None:
        cols = jnp.concatenate([cols, extra_cols], axis=1)
        wm = jnp.concatenate([wm, extra_w], axis=0)
    out2d = fused_matmul(cols, wm, scale=scale, shift=shift,
                         residual=residual2d, relu=relu)
    return out2d.reshape(n, ho, wo, cout)


# ----------------------------------------------------------------------------
# BasicBlock / NetworkBlock forward (Pallas path)
# ----------------------------------------------------------------------------
def basic_block_forward(x_nhwc, p, stride, equal_in_out):
    n, h, w, cin = x_nhwc.shape
    # act1 = relu(bn1(x))   (standalone: conv1's zero padding must follow it)
    act1 = bn_relu(x_nhwc.reshape(-1, cin), p["bn1_scale"], p["bn1_shift"]).reshape(
        n, h, w, cin
    )
    # conv1 (3x3, stride) with fused bn2 + relu epilogue (no extra HBM pass)
    out = conv3x3_fused(act1, p["conv1_w"], stride,
                        scale=p["bn2_scale"], shift=p["bn2_shift"], relu=True)
    n2, ho, wo, cout = out.shape
    # TODO(synk): dropout (dropRate > 0) would be applied here; no-op at 0.0.
    if equal_in_out:
        # conv2 (3x3, stride 1) with fused identity-residual add
        res2d = x_nhwc.reshape(-1, cin)
        y = conv3x3_fused(out, p["conv2_w"], 1, residual2d=res2d)
    else:
        # conv2 with the 1x1 shortcut fused into the SAME matmul by
        # concatenating the strided activation slice / shortcut weights along K
        xs = act1[:, ::stride, ::stride, :].reshape(n2 * ho * wo, cin)
        ws = p["shortcut_w"][:, :, 0, 0].T  # (Cin, Cout)
        y = conv3x3_fused(out, p["conv2_w"], 1, extra_cols=xs, extra_w=ws)
    return y


def network_block_forward(x_nchw, params_list, in_planes, out_planes, stride):
    x = jnp.transpose(x_nchw, (0, 2, 3, 1))  # NCHW -> NHWC
    for i, p in enumerate(params_list):
        s = stride if i == 0 else 1
        cin = in_planes if i == 0 else out_planes
        x = basic_block_forward(x, p, s, equal_in_out=(cin == out_planes))
    return jnp.transpose(x, (0, 3, 1, 2))  # back to NCHW


# ----------------------------------------------------------------------------
# Deterministic parameter init (shapes from BasicBlock.__init__)
# ----------------------------------------------------------------------------
def _bn_fold(key, c):
    k1, k2, k3, k4 = jax.random.split(key, 4)
    gamma = 1.0 + 0.1 * jax.random.normal(k1, (c,))
    beta = 0.1 * jax.random.normal(k2, (c,))
    mean = 0.1 * jax.random.normal(k3, (c,))
    var = 1.0 + 0.1 * jax.random.uniform(k4, (c,))
    scale = gamma / jnp.sqrt(var + EPS)
    shift = beta - mean * scale
    return scale.astype(jnp.float32), shift.astype(jnp.float32)


def init_basic_block_params(key, cin, cout):
    ks = jax.random.split(key, 5)
    bn1_scale, bn1_shift = _bn_fold(ks[0], cin)
    conv1_w = (jax.random.normal(ks[1], (cout, cin, 3, 3)) * (2.0 / (9 * cin)) ** 0.5).astype(
        jnp.float32
    )
    bn2_scale, bn2_shift = _bn_fold(ks[2], cout)
    conv2_w = (jax.random.normal(ks[3], (cout, cout, 3, 3)) * (2.0 / (9 * cout)) ** 0.5).astype(
        jnp.float32
    )
    params = dict(
        bn1_scale=bn1_scale,
        bn1_shift=bn1_shift,
        conv1_w=conv1_w,
        bn2_scale=bn2_scale,
        bn2_shift=bn2_shift,
        conv2_w=conv2_w,
        shortcut_w=None,
    )
    if cin != cout:
        params["shortcut_w"] = (
            jax.random.normal(ks[4], (cout, cin, 1, 1)) * (2.0 / cin) ** 0.5
        ).astype(jnp.float32)
    return params


def init_network_block_params(key, nb_layers, in_planes, out_planes):
    keys = jax.random.split(key, nb_layers)
    params = []
    for i in range(nb_layers):
        cin = in_planes if i == 0 else out_planes
        params.append(init_basic_block_params(keys[i], cin, out_planes))
    return params


# ----------------------------------------------------------------------------
# Pure-JAX reference (for correctness check only)
# ----------------------------------------------------------------------------
def _conv_ref(x_nhwc, w_oihw, stride, pad):
    return jax.lax.conv_general_dilated(
        x_nhwc,
        jnp.transpose(w_oihw, (2, 3, 1, 0)),
        (stride, stride),
        [(pad, pad), (pad, pad)],
        dimension_numbers=("NHWC", "HWIO", "NHWC"),
        precision=jax.lax.Precision.HIGHEST,
    )


def _basic_block_ref(x, p, stride, equal):
    act1 = jnp.maximum(x * p["bn1_scale"] + p["bn1_shift"], 0.0)
    out = _conv_ref(act1, p["conv1_w"], stride, 1)
    out = jnp.maximum(out * p["bn2_scale"] + p["bn2_shift"], 0.0)
    out = _conv_ref(out, p["conv2_w"], 1, 1)
    res = x if equal else _conv_ref(act1, p["shortcut_w"], stride, 0)
    return out + res


def network_block_reference(x_nchw, params_list, in_planes, out_planes, stride):
    x = jnp.transpose(x_nchw, (0, 2, 3, 1))
    for i, p in enumerate(params_list):
        s = stride if i == 0 else 1
        cin = in_planes if i == 0 else out_planes
        x = _basic_block_ref(x, p, s, cin == out_planes)
    return jnp.transpose(x, (0, 3, 1, 2))


# ----------------------------------------------------------------------------
if __name__ == "__main__":
    key = jax.random.PRNGKey(0)
    N, in_planes, out_planes = 2, 4, 8
    H = W = 16
    nb_layers, stride, dropRate = 2, 2, 0.0

    key, xk, pk = jax.random.split(key, 3)
    x_nchw = jax.random.normal(xk, (N, in_planes, H, W), dtype=jnp.float32)
    params = init_network_block_params(pk, nb_layers, in_planes, out_planes)

    fwd = functools.partial(
        network_block_forward,
        params_list=params,
        in_planes=in_planes,
        out_planes=out_planes,
        stride=stride,
    )
    out = jax.block_until_ready(fwd(x_nchw))

    ref = jax.block_until_ready(
        network_block_reference(x_nchw, params, in_planes, out_planes, stride)
    )

    assert out.shape == (N, out_planes, H // stride, W // stride), out.shape
    if bool(jnp.allclose(out, ref, atol=2e-3, rtol=2e-3)):
        print("KERNEL_OK")
    else:
        print("MISMATCH max_abs_err=", float(jnp.max(jnp.abs(out - ref))))
</pallas_src>

<mosaic_0001>
module attributes {stable_mosaic.version = 11 : i64} {
  func.func @_bn_relu_kernel(%arg0: i32, %arg1: memref<8x256xf32, #tpu.memory_space<vmem>>, %arg2: memref<1x256xf32, #tpu.memory_space<vmem>>, %arg3: memref<1x256xf32, #tpu.memory_space<vmem>>, %arg4: memref<8x256xf32, #tpu.memory_space<vmem>>) attributes {dimension_semantics = [#tpu.dimension_semantics<parallel>], iteration_bounds = array<i64: 1>, scalar_prefetch = 0 : i64, scratch_operands = 0 : i64, tpu.core_type = #tpu.core_type<tc>, window_params = [{transform_indices = @transform_0, window_bounds = array<i64: 8, 256>}, {pipeline_mode = #tpu.pipeline_mode<synchronous>, transform_indices = @transform_1, window_bounds = array<i64: 1, 256>}, {pipeline_mode = #tpu.pipeline_mode<synchronous>, transform_indices = @transform_2, window_bounds = array<i64: 1, 256>}, {transform_indices = @transform_3, window_bounds = array<i64: 8, 256>}]} {
    %c0 = arith.constant 0 : index
    %c0_0 = arith.constant 0 : index
    %0 = vector.load %arg1[%c0, %c0_0] : memref<8x256xf32, #tpu.memory_space<vmem>>, vector<8x256xf32>
    %c0_1 = arith.constant 0 : index
    %c0_2 = arith.constant 0 : index
    %1 = vector.load %arg2[%c0_1, %c0_2] : memref<1x256xf32, #tpu.memory_space<vmem>>, vector<1x256xf32>
    %2 = vector.broadcast %1 : vector<1x256xf32> to vector<8x256xf32>
    %3 = arith.mulf %0, %2 : vector<8x256xf32>
    %c0_3 = arith.constant 0 : index
    %c0_4 = arith.constant 0 : index
    %4 = vector.load %arg3[%c0_3, %c0_4] : memref<1x256xf32, #tpu.memory_space<vmem>>, vector<1x256xf32>
    %5 = vector.broadcast %4 : vector<1x256xf32> to vector<8x256xf32>
    %6 = arith.addf %3, %5 : vector<8x256xf32>
    %cst = arith.constant 0.000000e+00 : f32
    %7 = vector.broadcast %cst : f32 to vector<8x256xf32>
    %8 = arith.maximumf %6, %7 : vector<8x256xf32>
    %c0_5 = arith.constant 0 : index
    %c0_6 = arith.constant 0 : index
    %9 = vector.load %arg4[%c0_5, %c0_6] : memref<8x256xf32, #tpu.memory_space<vmem>>, vector<8x256xf32>
    tpu.vector_store %arg4[%c0_5, %c0_6], %8 {strides = array<i32>} : memref<8x256xf32, #tpu.memory_space<vmem>>, vector<8x256xf32>,
    return
  }
  func.func @transform_0(%arg0: i32) -> (i32, i32) {
    %c0_i32 = arith.constant 0 : i32
    %c0_i32_0 = arith.constant 0 : i32
    return %arg0, %c0_i32 : i32, i32
  }
  func.func @transform_1(%arg0: i32) -> (i32, i32) {
    %c0_i32 = arith.constant 0 : i32
    %c0_i32_0 = arith.constant 0 : i32
    %c0_i32_1 = arith.constant 0 : i32
    return %c0_i32, %c0_i32_0 : i32, i32
  }
  func.func @transform_2(%arg0: i32) -> (i32, i32) {
    %c0_i32 = arith.constant 0 : i32
    %c0_i32_0 = arith.constant 0 : i32
    %c0_i32_1 = arith.constant 0 : i32
    return %c0_i32, %c0_i32_0 : i32, i32
  }
  func.func @transform_3(%arg0: i32) -> (i32, i32) {
    %c0_i32 = arith.constant 0 : i32
    %c0_i32_0 = arith.constant 0 : i32
    return %arg0, %c0_i32 : i32, i32
  }
}

</mosaic_0001>

<llo_original>
// kernel: tpu_custom_call.1
$region0: #{tpu_custom_call.1}
  #allocation0 [shape = 'u32[]', space=smem, size = 0x4, offset = 0x4, fixed_abs, tag = 'smem constant byte address 0x4 - core index']
  #allocation1 [shape = 'u32[144,128]{1,0:T(1,128)}', space=vmem, size = 0x12000, scoped, tag = 'internal scratch']
  %s0 = inlined_call_operand.hbm [shape: f32[8,256], index: 0, kind: input, shape index: {}]
  %s1 = inlined_call_operand.hbm [shape: f32[1,256], index: 1, kind: input, shape index: {}]
  %s2 = inlined_call_operand.vmem [shape: f32[1,256], index: 2, kind: input, shape index: {}]
  %s3 = inlined_call_operand.hbm [shape: f32[8,256], index: 3, kind: output, shape index: {}]
  %s4 = sld [smem:[#allocation0]]
  $region30: #{tpu_custom_call.1} parent=0
    _
  %s6 = ssub.s32 1, %s4
  %s7 = scalar_select 0, %s6, %s4
  $region1: #{tpu_custom_call.1} parent=0
    #allocation2 [shape = 'u8[8192]{0}', space=vmem, size = 0x2000, scoped, tag = 'input window, operand 0, single buffered']
    #allocation3 [shape = 's32[1]{0}', space=sflag, size = 0x4, scoped, tag = 'scoped memory for tpu_custom_call.1']
    #allocation4 [shape = 's32[1]{0}', space=sflag, size = 0x4, scoped, tag = 'scoped memory for tpu_custom_call.1']
    #allocation5 [shape = 'u8[1024]{0}', space=vmem, size = 0x400, scoped, tag = 'input window, operand 1, single buffered']
    #allocation6 [shape = 's32[1]{0}', space=sflag, size = 0x4, scoped, tag = 'scoped memory for tpu_custom_call.1']
    #allocation7 [shape = 'u8[8192]{0}', space=vmem, size = 0x2000, scoped, tag = 'output window, operand 0, single buffered']
    %8 = vsyncpa [#allocation3], 0
    %9 = vsyncpa [#allocation6], 0
    %10 = vsyncpa [#allocation4], 0
    // Predicated region
    $region2: #{tpu_custom_call.1} parent=1 // pred_check
      _
    $region3: #{tpu_custom_call.1} parent=1 // pred_check_branch
      %12 = sbr.rel (0) target = $region5
    $region4: #{tpu_custom_call.1} parent=1 // pred_region
      %s14 = ssub.s32 256, 256
      %15 = vsyncadd [#allocation3], %s14
      %s17 = sshll.u32 [#allocation2], 4
      %s18 = int_to_ptr.vmem [resolvable:$true] %s17
      %20 = dma.hbm_to_vmem [thread:$0]  %s0, 256, %s18, [#allocation3]
    $region5: #{tpu_custom_call.1} parent=1 // pred_fallthru
      _
    // Predicated region
    $region6: #{tpu_custom_call.1} parent=1 // pred_check
      _
    $region7: #{tpu_custom_call.1} parent=1 // pred_check_branch
      %22 = sbr.rel (0) target = $region9
    $region8: #{tpu_custom_call.1} parent=1 // pred_region
      %s24 = ssub.s32 32, 32
      %25 = vsyncadd [#allocation6], %s24
      %s27 = sshll.u32 [#allocation5], 4
      %s28 = int_to_ptr.vmem [resolvable:$true] %s27
      %30 = dma.hbm_to_vmem [thread:$0]  %s1, 32, %s28, [#allocation6]
    $region9: #{tpu_custom_call.1} parent=1 // pred_fallthru
      _
    // Predicated region
    $region10: #{tpu_custom_call.1} parent=1 // pred_check
      _
    $region11: #{tpu_custom_call.1} parent=1 // pred_check_branch
      %32 = sbr.rel (0) target = $region13
    $region12: #{tpu_custom_call.1} parent=1 // pred_region
      _
    $region13: #{tpu_custom_call.1} parent=1 // pred_fallthru
      _
    // Predicated region
    $region14: #{tpu_custom_call.1} parent=1 // pred_check
      _
    $region15: #{tpu_custom_call.1} parent=1 // pred_check_branch
      %34 = sbr.rel (0) target = $region17
    $region16: #{tpu_custom_call.1} parent=1 // pred_region
      %35 = dma.done [#allocation3], 256
    $region17: #{tpu_custom_call.1} parent=1 // pred_fallthru
      _
    // Predicated region
    $region18: #{tpu_custom_call.1} parent=1 // pred_check
      _
    $region19: #{tpu_custom_call.1} parent=1 // pred_check_branch
      %37 = sbr.rel (0) target = $region21
    $region20: #{tpu_custom_call.1} parent=1 // pred_region
      %38 = dma.done [#allocation6], 32
    $region21: #{tpu_custom_call.1} parent=1 // pred_fallthru
      _
    %v39 = vld [vmem:[#allocation2] sm:$0xff]
    %v40 = vld [vmem:[#allocation2 + $0x8] sm:$0xff]
    %v41 = vld [vmem:[#allocation5] sm:$0x3]
    %v43 = vlaneseq
    %v44 = vshrl.u32 %v43, 7
    %v45 = vsub.s32 0, %v44
    %v46 = vrot.slane %v41, %v45
    %v47 = vlaneseq
    %v48 = vshrl.u32 %v47, 7
    %v49 = vsub.s32 1, %v48
    %v50 = vrot.slane %v41, %v49
    %v53 = vmul.f32 %v39, %v46
    %v54 = vmul.f32 %v40, %v50
    %v55 = vld [vmem:[%s2] sm:$0x3]
    %v57 = vlaneseq
    %v58 = vshrl.u32 %v57, 7
    %v59 = vsub.s32 0, %v58
    %v60 = vrot.slane %v55, %v59
    %v61 = vlaneseq
    %v62 = vshrl.u32 %v61, 7
    %v63 = vsub.s32 1, %v62
    %v64 = vrot.slane %v55, %v63
    %v67 = vadd.f32 %v53, %v60
    %v68 = vadd.f32 %v54, %v64
    %v69 = vmax.f32 %v67, 0.0
    %v70 = vmax.f32 %v68, 0.0
    %71 = vst [vmem:[#allocation7] sm:$0xff] %v69
    %72 = vst [vmem:[#allocation7 + $0x8] sm:$0xff] %v70
    // Predicated region
    $region22: #{tpu_custom_call.1} parent=1 // pred_check
      _
    $region23: #{tpu_custom_call.1} parent=1 // pred_check_branch
      %74 = sbr.rel (0) target = $region25
    $region24: #{tpu_custom_call.1} parent=1 // pred_region
      %s76 = ssub.s32 256, 256
      %77 = vsyncadd [#allocation4], %s76
      %s79 = sshll.u32 [#allocation7], 4
      %s80 = int_to_ptr.vmem [resolvable:$true] %s79
      %82 = dma.vmem_to_hbm [thread:$0]  %s80, 256, %s3, [#allocation4]
    $region25: #{tpu_custom_call.1} parent=1 // pred_fallthru
      _
    // Predicated region
    $region26: #{tpu_custom_call.1} parent=1 // pred_check
      _
    $region27: #{tpu_custom_call.1} parent=1 // pred_check_branch
      %84 = sbr.rel (0) target = $region29
    $region28: #{tpu_custom_call.1} parent=1 // pred_region
      %85 = dma.done [#allocation4], 256
    $region29: #{tpu_custom_call.1} parent=1 // pred_fallthru
      _
    %86 = vsyncpa [#allocation3], 1
    %87 = vsyncpa [#allocation6], 1
    %88 = vsyncpa [#allocation4], 1

</llo_original>
